<compile_context>
chip_gen: v5e
topology: v5e:2x2
jax: 0.10.0
libtpu: 0.0.40
codegen_flags: <defaults>
</compile_context>

<pallas_src>
import functools

import jax
import jax.numpy as jnp
import numpy as np
from jax.experimental import pallas as pl
from jax.experimental.pallas import tpu as pltpu


def _round_up(a, b):
    return (a + b - 1) // b * b


def _pick_tile_rows(Ho, W):
    """Output rows per tile.

    Aim for a flattened tile width (TH*W) that is a small multiple of 128
    lanes so output stores are unmasked, while keeping the input slab small
    enough that double-buffered tiles stay well inside v7x's 64 MiB VMEM.
    """
    if W >= 128:
        return min(8, Ho)
    th = max(1, 128 // W)
    while th * W < 128 and th < Ho:
        th += 1
    return min(th, Ho)


def _gated_conv_kernel(x_ref, w_ref, b_ref, o_ref, *, KH, KW, W, TW, Cpad, Cout):
    # x_ref : (Cin, LH)            bf16  row-tile slab, spatial flattened
    #                                    row-major on the lane axis.
    # w_ref : (KH*KW, 2*Cpad, Cin) bf16  per-tap [feature ; mask] weights.
    # b_ref : (2*Cpad, 1)          f32   [feature ; mask] biases.
    # o_ref : (Cout, TW)                 gated output, spatial on lanes.
    acc = jnp.zeros((2 * Cpad, TW), jnp.float32)
    # Direct per-tap accumulation: lane-dense 2-D slice + small MXU matmul,
    # no patches buffer, no reshape/concatenate retiles.
    for kh in range(KH):
        for kw in range(KW):
            shift = kh * W + kw
            tap = x_ref[:, shift:shift + TW]                 # (Cin, TW) bf16
            acc = acc + jax.lax.dot_general(
                w_ref[kh * KW + kw], tap,
                dimension_numbers=(((1,), (0,)), ((), ())),
                preferred_element_type=jnp.float32)
    acc = acc + b_ref[...]                                   # broadcast over lanes

    feat = acc[:Cpad]                                        # sublane-aligned split
    gate = acc[Cpad:]

    act = jnp.maximum(feat, 0.2 * feat)                      # LeakyReLU(0.2)
    sig = pl.reciprocal(1.0 + jnp.exp(-gate), approx=False)  # exact sigmoid
    o_ref[...] = (act * sig)[:Cout].astype(o_ref.dtype)


def gated_conv2d_with_activation(x_nchw, w_feat, b_feat, w_mask, b_mask):
    """x_nchw: (N, Cin, H, W); w_*: (Cout, Cin, KH, KW) already lr-scaled."""
    N, Cin, H, W = x_nchw.shape
    Cout, _, KH, KW = w_feat.shape
    Ho, Wo = H - KH + 1, W - KW + 1          # padding = 0, stride = 1
    assert Ho > 0 and Wo > 0

    TH = _pick_tile_rows(Ho, W)              # output rows per grid step
    nt = -(-Ho // TH)                        # number of row tiles
    TW = _round_up(TH * W, 128)              # lane-dense compute width per tile
    LH = (KH - 1) * W + (KW - 1) + TW        # flattened input slab per tile
    Cpad = _round_up(Cout, 8)                # sublane-aligned channel padding

    # ---- input: flatten spatial, zero-pad the tail, extract per-tile slabs.
    # Overlap between consecutive slabs is only (KH-1) rows + (KW-1) lanes.
    flat_needed = (nt - 1) * TH * W + LH
    x_flat = x_nchw.reshape(N, Cin, H * W)
    if flat_needed > H * W:
        x_flat = jnp.pad(x_flat, ((0, 0), (0, 0), (0, flat_needed - H * W)))
    slabs = jnp.stack(
        [x_flat[:, :, r * TH * W: r * TH * W + LH] for r in range(nt)],
        axis=1).astype(jnp.bfloat16)                         # (N, nt, Cin, LH)

    # ---- weights: per-tap fused [feature ; mask] matrices, bf16 for the MXU.
    def _prep_w(w):                                          # -> (KH*KW, Cpad, Cin)
        w = jnp.transpose(w, (2, 3, 0, 1)).reshape(KH * KW, Cout, Cin)
        if Cpad > Cout:
            w = jnp.pad(w, ((0, 0), (0, Cpad - Cout), (0, 0)))
        return w

    w_fused = jnp.concatenate([_prep_w(w_feat), _prep_w(w_mask)],
                              axis=1).astype(jnp.bfloat16)   # (KH*KW, 2*Cpad, Cin)

    def _prep_b(b):
        return jnp.pad(b, (0, Cpad - Cout)) if Cpad > Cout else b

    b_fused = jnp.concatenate([_prep_b(b_feat), _prep_b(b_mask)],
                              axis=0).reshape(2 * Cpad, 1).astype(jnp.float32)

    kernel = functools.partial(_gated_conv_kernel, KH=KH, KW=KW, W=W,
                               TW=TW, Cpad=Cpad, Cout=Cout)

    out = pl.pallas_call(
        kernel,
        out_shape=jax.ShapeDtypeStruct((N, Cout, nt * TW), x_nchw.dtype),
        grid=(N, nt),
        in_specs=[
            # one (Cin, LH) slab per (image, row-tile); auto double-buffered
            pl.BlockSpec((None, None, Cin, LH), lambda n, r: (n, r, 0, 0)),
            # weights / bias: constant block index -> stay resident in VMEM
            pl.BlockSpec((KH * KW, 2 * Cpad, Cin), lambda n, r: (0, 0, 0)),
            pl.BlockSpec((2 * Cpad, 1), lambda n, r: (0, 0)),
        ],
        out_specs=pl.BlockSpec((None, Cout, TW), lambda n, r: (n, 0, r)),
        compiler_params=pltpu.CompilerParams(
            dimension_semantics=("parallel", "parallel"),
            vmem_limit_bytes=32 * 1024 * 1024),
    )(slabs, w_fused, b_fused)

    # (N, Cout, nt*TW) -> drop lane padding -> (N, Cout, nt*TH, W) -> valid crop.
    out = out.reshape(N, Cout, nt, TW)[:, :, :, :TH * W]
    out = out.reshape(N, Cout, nt * TH, W)[:, :, :Ho, :Wo]
    return out


def _reference(x_nchw, w_feat, b_feat, w_mask, b_mask):
    """Pure-JAX f32 reference (matches the PyTorch module semantics)."""
    dn = ("NCHW", "OIHW", "NCHW")
    cx = jax.lax.conv_general_dilated(
        x_nchw, w_feat, (1, 1), "VALID", dimension_numbers=dn)
    cx = cx + b_feat[None, :, None, None]
    cm = jax.lax.conv_general_dilated(
        x_nchw, w_mask, (1, 1), "VALID", dimension_numbers=dn)
    cm = cm + b_mask[None, :, None, None]
    act = jnp.where(cx >= 0, cx, 0.2 * cx)
    return act * jax.nn.sigmoid(cm)


if __name__ == "__main__":
    # Module hyperparameters (kernel_size=3, padding=0, LeakyReLU(0.2)).
    N, Cin, H, W = 2, 4, 16, 16
    Cout, KH, KW = 8, 3, 3

    key = jax.random.PRNGKey(0)
    kx, kwf, kwm = jax.random.split(key, 3)

    x = jax.random.normal(kx, (N, Cin, H, W), dtype=jnp.float32)

    # EqualizedConv2d: normal-init weights scaled at forward time by
    # sqrt(2 / fan_in); bias initialized to zero (initBiasToZero=True).
    eq_scale = jnp.sqrt(2.0 / (Cin * KH * KW)).astype(jnp.float32)
    w_feat = jax.random.normal(kwf, (Cout, Cin, KH, KW), jnp.float32) * eq_scale
    w_mask = jax.random.normal(kwm, (Cout, Cin, KH, KW), jnp.float32) * eq_scale
    b_feat = jnp.zeros((Cout,), jnp.float32)
    b_mask = jnp.zeros((Cout,), jnp.float32)

    out = gated_conv2d_with_activation(x, w_feat, b_feat, w_mask, b_mask)
    out = jax.block_until_ready(out)

    ref = jax.block_until_ready(_reference(x, w_feat, b_feat, w_mask, b_mask))
    # Tolerance accounts for the bf16 GEMM operands (f32 accumulation); the
    # sigmoid gate itself uses the exact (non-approx) reciprocal.
    np.testing.assert_allclose(np.asarray(out), np.asarray(ref),
                               rtol=3e-2, atol=3e-2)
    assert out.shape == (N, Cout, H - KH + 1, W - KW + 1)

    print("KERNEL_OK")
</pallas_src>

<mosaic_0001>
module attributes {stable_mosaic.version = 11 : i64} {
  func.func @_gated_conv_kernel(%arg0: i32, %arg1: i32, %arg2: memref<1x1x4x162xbf16, #tpu.memory_space<vmem>>, %arg3: memref<9x16x4xbf16, #tpu.memory_space<vmem>>, %arg4: memref<16x1xf32, #tpu.memory_space<vmem>>, %arg5: memref<1x8x128xf32, #tpu.memory_space<vmem>>) attributes {dimension_semantics = [#tpu.dimension_semantics<parallel>, #tpu.dimension_semantics<parallel>], iteration_bounds = array<i64: 2, 2>, scalar_prefetch = 0 : i64, scratch_operands = 0 : i64, tpu.core_type = #tpu.core_type<tc>, window_params = [{transform_indices = @transform_0, window_bounds = array<i64: 1, 1, 4, 162>}, {pipeline_mode = #tpu.pipeline_mode<synchronous>, transform_indices = @transform_1, window_bounds = array<i64: 9, 16, 4>}, {pipeline_mode = #tpu.pipeline_mode<synchronous>, transform_indices = @transform_2, window_bounds = array<i64: 16, 1>}, {transform_indices = @transform_3, window_bounds = array<i64: 1, 8, 128>}]} {
    %cst = arith.constant 0.000000e+00 : f32
    %0 = vector.broadcast %cst : f32 to vector<16x128xf32>
    %c0 = arith.constant 0 : index
    %c0_0 = arith.constant 0 : index
    %c0_1 = arith.constant 0 : index
    %c0_2 = arith.constant 0 : index
    %1 = vector.load %arg2[%c0, %c0_0, %c0_1, %c0_2] : memref<1x1x4x162xbf16, #tpu.memory_space<vmem>>, vector<1x1x4x128xbf16>
    %2 = vector.shape_cast %1 : vector<1x1x4x128xbf16> to vector<4x128xbf16>
    %c0_3 = arith.constant 0 : index
    %c0_4 = arith.constant 0 : index
    %c0_5 = arith.constant 0 : index
    %3 = vector.load %arg3[%c0_3, %c0_4, %c0_5] : memref<9x16x4xbf16, #tpu.memory_space<vmem>>, vector<1x16x4xbf16>
    %4 = vector.shape_cast %3 : vector<1x16x4xbf16> to vector<16x4xbf16>
    %cst_6 = arith.constant dense<0.000000e+00> : vector<16x128xf32>
    %5 = tpu.matmul %4, %2, %cst_6 {dimension_numbers = #tpu.dot_dimension_numbers<[1], [0], [0], [1], [0, 0, 1, 1], [], []>} : vector<16x4xbf16>, vector<4x128xbf16>, vector<16x128xf32> -> vector<16x128xf32>
    %6 = arith.addf %0, %5 : vector<16x128xf32>
    %c0_7 = arith.constant 0 : index
    %c0_8 = arith.constant 0 : index
    %c0_9 = arith.constant 0 : index
    %c1 = arith.constant 1 : index
    %7 = vector.load %arg2[%c0_7, %c0_8, %c0_9, %c1] : memref<1x1x4x162xbf16, #tpu.memory_space<vmem>>, vector<1x1x4x128xbf16>
    %8 = vector.shape_cast %7 : vector<1x1x4x128xbf16> to vector<4x128xbf16>
    %c1_10 = arith.constant 1 : index
    %c0_11 = arith.constant 0 : index
    %c0_12 = arith.constant 0 : index
    %9 = vector.load %arg3[%c1_10, %c0_11, %c0_12] : memref<9x16x4xbf16, #tpu.memory_space<vmem>>, vector<1x16x4xbf16>
    %10 = vector.shape_cast %9 : vector<1x16x4xbf16> to vector<16x4xbf16>
    %cst_13 = arith.constant dense<0.000000e+00> : vector<16x128xf32>
    %11 = tpu.matmul %10, %8, %cst_13 {dimension_numbers = #tpu.dot_dimension_numbers<[1], [0], [0], [1], [0, 0, 1, 1], [], []>} : vector<16x4xbf16>, vector<4x128xbf16>, vector<16x128xf32> -> vector<16x128xf32>
    %12 = arith.addf %6, %11 : vector<16x128xf32>
    %c0_14 = arith.constant 0 : index
    %c0_15 = arith.constant 0 : index
    %c0_16 = arith.constant 0 : index
    %c2 = arith.constant 2 : index
    %13 = vector.load %arg2[%c0_14, %c0_15, %c0_16, %c2] : memref<1x1x4x162xbf16, #tpu.memory_space<vmem>>, vector<1x1x4x128xbf16>
    %14 = vector.shape_cast %13 : vector<1x1x4x128xbf16> to vector<4x128xbf16>
    %c2_17 = arith.constant 2 : index
    %c0_18 = arith.constant 0 : index
    %c0_19 = arith.constant 0 : index
    %15 = vector.load %arg3[%c2_17, %c0_18, %c0_19] : memref<9x16x4xbf16, #tpu.memory_space<vmem>>, vector<1x16x4xbf16>
    %16 = vector.shape_cast %15 : vector<1x16x4xbf16> to vector<16x4xbf16>
    %cst_20 = arith.constant dense<0.000000e+00> : vector<16x128xf32>
    %17 = tpu.matmul %16, %14, %cst_20 {dimension_numbers = #tpu.dot_dimension_numbers<[1], [0], [0], [1], [0, 0, 1, 1], [], []>} : vector<16x4xbf16>, vector<4x128xbf16>, vector<16x128xf32> -> vector<16x128xf32>
    %18 = arith.addf %12, %17 : vector<16x128xf32>
    %c0_21 = arith.constant 0 : index
    %c0_22 = arith.constant 0 : index
    %c0_23 = arith.constant 0 : index
    %c16 = arith.constant 16 : index
    %19 = vector.load %arg2[%c0_21, %c0_22, %c0_23, %c16] : memref<1x1x4x162xbf16, #tpu.memory_space<vmem>>, vector<1x1x4x128xbf16>
    %20 = vector.shape_cast %19 : vector<1x1x4x128xbf16> to vector<4x128xbf16>
    %c3 = arith.constant 3 : index
    %c0_24 = arith.constant 0 : index
    %c0_25 = arith.constant 0 : index
    %21 = vector.load %arg3[%c3, %c0_24, %c0_25] : memref<9x16x4xbf16, #tpu.memory_space<vmem>>, vector<1x16x4xbf16>
    %22 = vector.shape_cast %21 : vector<1x16x4xbf16> to vector<16x4xbf16>
    %cst_26 = arith.constant dense<0.000000e+00> : vector<16x128xf32>
    %23 = tpu.matmul %22, %20, %cst_26 {dimension_numbers = #tpu.dot_dimension_numbers<[1], [0], [0], [1], [0, 0, 1, 1], [], []>} : vector<16x4xbf16>, vector<4x128xbf16>, vector<16x128xf32> -> vector<16x128xf32>
    %24 = arith.addf %18, %23 : vector<16x128xf32>
    %c0_27 = arith.constant 0 : index
    %c0_28 = arith.constant 0 : index
    %c0_29 = arith.constant 0 : index
    %c17 = arith.constant 17 : index
    %25 = vector.load %arg2[%c0_27, %c0_28, %c0_29, %c17] : memref<1x1x4x162xbf16, #tpu.memory_space<vmem>>, vector<1x1x4x128xbf16>
    %26 = vector.shape_cast %25 : vector<1x1x4x128xbf16> to vector<4x128xbf16>
    %c4 = arith.constant 4 : index
    %c0_30 = arith.constant 0 : index
    %c0_31 = arith.constant 0 : index
    %27 = vector.load %arg3[%c4, %c0_30, %c0_31] : memref<9x16x4xbf16, #tpu.memory_space<vmem>>, vector<1x16x4xbf16>
    %28 = vector.shape_cast %27 : vector<1x16x4xbf16> to vector<16x4xbf16>
    %cst_32 = arith.constant dense<0.000000e+00> : vector<16x128xf32>
    %29 = tpu.matmul %28, %26, %cst_32 {dimension_numbers = #tpu.dot_dimension_numbers<[1], [0], [0], [1], [0, 0, 1, 1], [], []>} : vector<16x4xbf16>, vector<4x128xbf16>, vector<16x128xf32> -> vector<16x128xf32>
    %30 = arith.addf %24, %29 : vector<16x128xf32>
    %c0_33 = arith.constant 0 : index
    %c0_34 = arith.constant 0 : index
    %c0_35 = arith.constant 0 : index
    %c18 = arith.constant 18 : index
    %31 = vector.load %arg2[%c0_33, %c0_34, %c0_35, %c18] : memref<1x1x4x162xbf16, #tpu.memory_space<vmem>>, vector<1x1x4x128xbf16>
    %32 = vector.shape_cast %31 : vector<1x1x4x128xbf16> to vector<4x128xbf16>
    %c5 = arith.constant 5 : index
    %c0_36 = arith.constant 0 : index
    %c0_37 = arith.constant 0 : index
    %33 = vector.load %arg3[%c5, %c0_36, %c0_37] : memref<9x16x4xbf16, #tpu.memory_space<vmem>>, vector<1x16x4xbf16>
    %34 = vector.shape_cast %33 : vector<1x16x4xbf16> to vector<16x4xbf16>
    %cst_38 = arith.constant dense<0.000000e+00> : vector<16x128xf32>
    %35 = tpu.matmul %34, %32, %cst_38 {dimension_numbers = #tpu.dot_dimension_numbers<[1], [0], [0], [1], [0, 0, 1, 1], [], []>} : vector<16x4xbf16>, vector<4x128xbf16>, vector<16x128xf32> -> vector<16x128xf32>
    %36 = arith.addf %30, %35 : vector<16x128xf32>
    %c0_39 = arith.constant 0 : index
    %c0_40 = arith.constant 0 : index
    %c0_41 = arith.constant 0 : index
    %c32 = arith.constant 32 : index
    %37 = vector.load %arg2[%c0_39, %c0_40, %c0_41, %c32] : memref<1x1x4x162xbf16, #tpu.memory_space<vmem>>, vector<1x1x4x128xbf16>
    %38 = vector.shape_cast %37 : vector<1x1x4x128xbf16> to vector<4x128xbf16>
    %c6 = arith.constant 6 : index
    %c0_42 = arith.constant 0 : index
    %c0_43 = arith.constant 0 : index
    %39 = vector.load %arg3[%c6, %c0_42, %c0_43] : memref<9x16x4xbf16, #tpu.memory_space<vmem>>, vector<1x16x4xbf16>
    %40 = vector.shape_cast %39 : vector<1x16x4xbf16> to vector<16x4xbf16>
    %cst_44 = arith.constant dense<0.000000e+00> : vector<16x128xf32>
    %41 = tpu.matmul %40, %38, %cst_44 {dimension_numbers = #tpu.dot_dimension_numbers<[1], [0], [0], [1], [0, 0, 1, 1], [], []>} : vector<16x4xbf16>, vector<4x128xbf16>, vector<16x128xf32> -> vector<16x128xf32>
    %42 = arith.addf %36, %41 : vector<16x128xf32>
    %c0_45 = arith.constant 0 : index
    %c0_46 = arith.constant 0 : index
    %c0_47 = arith.constant 0 : index
    %c33 = arith.constant 33 : index
    %43 = vector.load %arg2[%c0_45, %c0_46, %c0_47, %c33] : memref<1x1x4x162xbf16, #tpu.memory_space<vmem>>, vector<1x1x4x128xbf16>
    %44 = vector.shape_cast %43 : vector<1x1x4x128xbf16> to vector<4x128xbf16>
    %c7 = arith.constant 7 : index
    %c0_48 = arith.constant 0 : index
    %c0_49 = arith.constant 0 : index
    %45 = vector.load %arg3[%c7, %c0_48, %c0_49] : memref<9x16x4xbf16, #tpu.memory_space<vmem>>, vector<1x16x4xbf16>
    %46 = vector.shape_cast %45 : vector<1x16x4xbf16> to vector<16x4xbf16>
    %cst_50 = arith.constant dense<0.000000e+00> : vector<16x128xf32>
    %47 = tpu.matmul %46, %44, %cst_50 {dimension_numbers = #tpu.dot_dimension_numbers<[1], [0], [0], [1], [0, 0, 1, 1], [], []>} : vector<16x4xbf16>, vector<4x128xbf16>, vector<16x128xf32> -> vector<16x128xf32>
    %48 = arith.addf %42, %47 : vector<16x128xf32>
    %c0_51 = arith.constant 0 : index
    %c0_52 = arith.constant 0 : index
    %c0_53 = arith.constant 0 : index
    %c34 = arith.constant 34 : index
    %49 = vector.load %arg2[%c0_51, %c0_52, %c0_53, %c34] : memref<1x1x4x162xbf16, #tpu.memory_space<vmem>>, vector<1x1x4x128xbf16>
    %50 = vector.shape_cast %49 : vector<1x1x4x128xbf16> to vector<4x128xbf16>
    %c8 = arith.constant 8 : index
    %c0_54 = arith.constant 0 : index
    %c0_55 = arith.constant 0 : index
    %51 = vector.load %arg3[%c8, %c0_54, %c0_55] : memref<9x16x4xbf16, #tpu.memory_space<vmem>>, vector<1x16x4xbf16>
    %52 = vector.shape_cast %51 : vector<1x16x4xbf16> to vector<16x4xbf16>
    %cst_56 = arith.constant dense<0.000000e+00> : vector<16x128xf32>
    %53 = tpu.matmul %52, %50, %cst_56 {dimension_numbers = #tpu.dot_dimension_numbers<[1], [0], [0], [1], [0, 0, 1, 1], [], []>} : vector<16x4xbf16>, vector<4x128xbf16>, vector<16x128xf32> -> vector<16x128xf32>
    %54 = arith.addf %48, %53 : vector<16x128xf32>
    %c0_57 = arith.constant 0 : index
    %c0_58 = arith.constant 0 : index
    %55 = vector.load %arg4[%c0_57, %c0_58] : memref<16x1xf32, #tpu.memory_space<vmem>>, vector<16x1xf32>
    %56 = vector.broadcast %55 : vector<16x1xf32> to vector<16x128xf32>
    %57 = arith.addf %54, %56 : vector<16x128xf32>
    %58 = vector.extract_strided_slice %57 {offsets = [0, 0], sizes = [8, 128], strides = [1, 1]} : vector<16x128xf32> to vector<8x128xf32>
    %59 = vector.extract_strided_slice %57 {offsets = [8, 0], sizes = [8, 128], strides = [1, 1]} : vector<16x128xf32> to vector<8x128xf32>
    %cst_59 = arith.constant 2.000000e-01 : f32
    %60 = vector.broadcast %cst_59 : f32 to vector<8x128xf32>
    %61 = arith.mulf %60, %58 : vector<8x128xf32>
    %62 = arith.maximumf %58, %61 : vector<8x128xf32>
    %cst_60 = arith.constant 0.000000e+00 : f32
    %63 = vector.broadcast %cst_60 : f32 to vector<8x128xf32>
    %64 = arith.subf %63, %59 : vector<8x128xf32>
    %65 = math.exp %64 : vector<8x128xf32>
    %cst_61 = arith.constant 1.000000e+00 : f32
    %66 = vector.broadcast %cst_61 : f32 to vector<8x128xf32>
    %67 = arith.addf %66, %65 : vector<8x128xf32>
    %68 = tpu.reciprocal %67 : vector<8x128xf32> -> vector<8x128xf32>
    %69 = arith.mulf %62, %68 : vector<8x128xf32>
    %c0_62 = arith.constant 0 : index
    %c0_63 = arith.constant 0 : index
    %c0_64 = arith.constant 0 : index
    %70 = vector.load %arg5[%c0_62, %c0_63, %c0_64] : memref<1x8x128xf32, #tpu.memory_space<vmem>>, vector<1x8x128xf32>
    %71 = vector.shape_cast %70 : vector<1x8x128xf32> to vector<8x128xf32>
    %72 = vector.shape_cast %69 : vector<8x128xf32> to vector<1x8x128xf32>
    tpu.vector_store %arg5[%c0_62, %c0_63, %c0_64], %72 {strides = array<i32>} : memref<1x8x128xf32, #tpu.memory_space<vmem>>, vector<1x8x128xf32>,
    return
  }
  func.func @transform_0(%arg0: i32, %arg1: i32) -> (i32, i32, i32, i32) {
    %c0_i32 = arith.constant 0 : i32
    %c0_i32_0 = arith.constant 0 : i32
    %c0_i32_1 = arith.constant 0 : i32
    return %arg0, %arg1, %c0_i32, %c0_i32_0 : i32, i32, i32, i32
  }
  func.func @transform_1(%arg0: i32, %arg1: i32) -> (i32, i32, i32) {
    %c0_i32 = arith.constant 0 : i32
    %c0_i32_0 = arith.constant 0 : i32
    %c0_i32_1 = arith.constant 0 : i32
    %c0_i32_2 = arith.constant 0 : i32
    return %c0_i32, %c0_i32_0, %c0_i32_1 : i32, i32, i32
  }
  func.func @transform_2(%arg0: i32, %arg1: i32) -> (i32, i32) {
    %c0_i32 = arith.constant 0 : i32
    %c0_i32_0 = arith.constant 0 : i32
    %c0_i32_1 = arith.constant 0 : i32
    return %c0_i32, %c0_i32_0 : i32, i32
  }
  func.func @transform_3(%arg0: i32, %arg1: i32) -> (i32, i32, i32) {
    %c0_i32 = arith.constant 0 : i32
    %c0_i32_0 = arith.constant 0 : i32
    return %arg0, %c0_i32, %arg1 : i32, i32, i32
  }
}

</mosaic_0001>

<llo_original>
// kernel: tpu_custom_call.1
$region0: #{tpu_custom_call.1}
  #allocation0 [shape = 'u32[]', space=smem, size = 0x4, offset = 0x4, fixed_abs, tag = 'smem constant byte address 0x4 - core index']
  #allocation1 [shape = 'u32[72,128]{1,0:T(1,128)}', space=vmem, size = 0x9000, scoped, tag = 'internal scratch']
  %s0 = inlined_call_operand.vmem [shape: bf16[2,2,4,162], index: 0, kind: input, shape index: {}]
  %s1 = inlined_call_operand.vmem [shape: bf16[9,16,4], index: 1, kind: input, shape index: {}]
  %s2 = inlined_call_operand.vmem [shape: f32[16,1], index: 2, kind: input, shape index: {}]
  %s3 = inlined_call_operand.hbm [shape: f32[2,8,256], index: 3, kind: output, shape index: {}]
  %s4 = sld [smem:[#allocation0]]
  $region45: #{tpu_custom_call.1} parent=0
    _
  %s6 = ssub.s32 1, %s4
  %s7 = scalar_select 0, %s6, %s4
  $region1: #{tpu_custom_call.1} parent=0
    #allocation2 [shape = 'u8[8192]{0}', space=vmem, size = 0x2000, scoped, tag = 'output window, operand 0']
    #allocation3 [shape = 's32[2]{0}', space=sflag, size = 0x8, scoped, tag = 'scoped memory for tpu_custom_call.1']
    %8 = vsyncpa [#allocation3], 0
    %s9 = scalar_lea.sflag [#allocation3], 1
    %10 = vsyncpa %s9, 0
    loop: start=0, step=1, limit=6
    $region2: #{tpu_custom_call.1} parent=1 // loop_pre_header
      _
    $region3: #{tpu_custom_call.1} parent=1 // loop_header
      %s12 = sphi 0, %s16
      %p13 = scmp.ge.s32.totalorder %s12, 6
      %s19 = sphi 0, %s31
      %s20 = sphi 0, %s27
      %s21 = sphi 0, %s19
      %s22 = sphi 0, %s20
      %s23 = sphi 0, %s21
      %s24 = sphi 0, %s22
      %s36 = sphi 0, %s38
      %s39 = sphi 0, %s36
      %s40 = sphi 0, %s39
      %s56 = sphi 0, %s40
      %s60 = sphi 0, %s60
      %s62 = sphi 0, %s60
      %s63 = sphi 0, %s62
      %s77 = sphi 0, %s63
      %s81 = sphi 0, %s81
      %s83 = sphi 0, %s81
      %s84 = sphi 0, %s83
      %s98 = sphi 0, %s84
      %s106 = sphi 0, %s108
      %s109 = sphi 0, %s106
      %s110 = sphi 0, %s109
      %s126 = sphi 0, %s110
    $region4: #{tpu_custom_call.1} parent=1 // loop_header_branch
      %15 = sbr.rel (%p13) target = $region8
    $region5: #{tpu_custom_call.1} parent=1 // loop_body
      %s17 = ssub.s32 %s12, 1
      %s18 = ssub.s32 %s12, 2
      %s25 = sadd.s32 1, %s20
      %p26 = scmp.ge.s32.totalorder %s25, 2
      %s27 = scalar_select %p26, 0, %s25
      %s28 = sadd.s32 1, %s19
      %s29 = scalar_select %p26, %s28, %s19
      %p30 = scmp.ge.s32.totalorder %s29, 2
      %s31 = scalar_select %p30, 0, %s29
      %s32 = ssub.s32 %s19, %s31
      %s33 = ssub.s32 %s20, %s27
      %s34 = sor.u32 %s32, %s33
      %p35 = scmp.eq.s32.totalorder %s34, 0
      %s37 = sadd.s32 %s36, 1
      %s38 = scalar_select %p35, %s36, %s37
      %p41 = pneg %p35
      %p42 = scmp.eq.s32.totalorder %s12, 3
      %p43 = por %p41, %p42
      %p44 = scmp.ne.s32.totalorder %s36, %s39
      %p45 = scmp.eq.s32.totalorder %s12, 0
      %p46 = por %p44, %p45
      %p47 = scmp.ne.s32.totalorder %s36, %s39
      %p48 = scmp.eq.s32.totalorder %s17, 3
      %p49 = por %p47, %p48
      %p50 = scmp.ne.s32.totalorder %s39, %s40
      %p51 = scmp.eq.s32.totalorder %s17, 0
      %p52 = por %p50, %p51
      %p53 = scmp.ne.s32.totalorder %s39, %s40
      %p54 = scmp.eq.s32.totalorder %s18, 3
      %p55 = por %p53, %p54
      %p57 = scmp.ne.s32.totalorder %s40, %s56
      %p58 = scmp.eq.s32.totalorder %s18, 0
      %p59 = por %p57, %p58
      %s61 = sadd.s32 %s60, 1
      %p64 = scmp.eq.s32.totalorder %s12, 3
      %p65 = scmp.ne.s32.totalorder %s60, %s62
      %p66 = scmp.eq.s32.totalorder %s12, 0
      %p67 = por %p65, %p66
      %p68 = scmp.ne.s32.totalorder %s60, %s62
      %p69 = scmp.eq.s32.totalorder %s17, 3
      %p70 = por %p68, %p69
      %p71 = scmp.ne.s32.totalorder %s62, %s63
      %p72 = scmp.eq.s32.totalorder %s17, 0
      %p73 = por %p71, %p72
      %p74 = scmp.ne.s32.totalorder %s62, %s63
      %p75 = scmp.eq.s32.totalorder %s18, 3
      %p76 = por %p74, %p75
      %p78 = scmp.ne.s32.totalorder %s63, %s77
      %p79 = scmp.eq.s32.totalorder %s18, 0
      %p80 = por %p78, %p79
      %s82 = sadd.s32 %s81, 1
      %p85 = scmp.eq.s32.totalorder %s12, 3
      %p86 = scmp.ne.s32.totalorder %s81, %s83
      %p87 = scmp.eq.s32.totalorder %s12, 0
      %p88 = por %p86, %p87
      %p89 = scmp.ne.s32.totalorder %s81, %s83
      %p90 = scmp.eq.s32.totalorder %s17, 3
      %p91 = por %p89, %p90
      %p92 = scmp.ne.s32.totalorder %s83, %s84
      %p93 = scmp.eq.s32.totalorder %s17, 0
      %p94 = por %p92, %p93
      %p95 = scmp.ne.s32.totalorder %s83, %s84
      %p96 = scmp.eq.s32.totalorder %s18, 3
      %p97 = por %p95, %p96
      %p99 = scmp.ne.s32.totalorder %s84, %s98
      %p100 = scmp.eq.s32.totalorder %s18, 0
      %p101 = por %p99, %p100
      %s102 = ssub.s32 %s19, %s31
      %s103 = ssub.s32 %s20, %s27
      %s104 = sor.u32 %s102, %s103
      %p105 = scmp.eq.s32.totalorder %s104, 0
      %s107 = sadd.s32 %s106, 1
      %s108 = scalar_select %p105, %s106, %s107
      %p111 = pneg %p105
      %p112 = scmp.eq.s32.totalorder %s12, 3
      %p113 = por %p111, %p112
      %p114 = scmp.ne.s32.totalorder %s106, %s109
      %p115 = scmp.eq.s32.totalorder %s12, 0
      %p116 = por %p114, %p115
      %p117 = scmp.ne.s32.totalorder %s106, %s109
      %p118 = scmp.eq.s32.totalorder %s17, 3
      %p119 = por %p117, %p118
      %p120 = scmp.ne.s32.totalorder %s109, %s110
      %p121 = scmp.eq.s32.totalorder %s17, 0
      %p122 = por %p120, %p121
      %p123 = scmp.ne.s32.totalorder %s109, %s110
      %p124 = scmp.eq.s32.totalorder %s18, 3
      %p125 = por %p123, %p124
      %p127 = scmp.ne.s32.totalorder %s110, %s126
      %p128 = scmp.eq.s32.totalorder %s18, 0
      %p129 = por %p127, %p128
      %p130 = scmp.le.s32.totalorder 1, %s12
      %p131 = scmp.lt.s32.totalorder %s12, 5
      %p132 = pnand %p130, %p131
      %p133 = pneg %p132
      // Predicated region
      $region9: #{tpu_custom_call.1} parent=5 // pred_check
        _
      $region10: #{tpu_custom_call.1} parent=5 // pred_check_branch
        %135 = sbr.rel (%p132) target = $region12
      $region11: #{tpu_custom_call.1} parent=5 // pred_region
        %s136 = ssub.s32 %s12, 1
        // Predicated region
        $region13: #{tpu_custom_call.1} parent=11 // pred_check
          %p137 = pneg %p73
        $region14: #{tpu_custom_call.1} parent=11 // pred_check_branch
          %139 = sbr.rel (%p137) target = $region16
        $region15: #{tpu_custom_call.1} parent=11 // pred_region
          _
        $region16: #{tpu_custom_call.1} parent=11 // pred_fallthru
          _
        // Predicated region
        $region17: #{tpu_custom_call.1} parent=11 // pred_check
          %p140 = pneg %p94
        $region18: #{tpu_custom_call.1} parent=11 // pred_check_branch
          %142 = sbr.rel (%p140) target = $region20
        $region19: #{tpu_custom_call.1} parent=11 // pred_region
          _
        $region20: #{tpu_custom_call.1} parent=11 // pred_fallthru
          _
      $region12: #{tpu_custom_call.1} parent=5 // pred_fallthru
        _
      %p143 = scmp.lt.s32.totalorder %s12, 4
      // Predicated region
      $region21: #{tpu_custom_call.1} parent=5 // pred_check
        %p144 = pneg %p143
      $region22: #{tpu_custom_call.1} parent=5 // pred_check_branch
        %146 = sbr.rel (%p144) target = $region24
      $region23: #{tpu_custom_call.1} parent=5 // pred_region
        // Predicated region
        $region25: #{tpu_custom_call.1} parent=23 // pred_check
          %p147 = pneg %p46
        $region26: #{tpu_custom_call.1} parent=23 // pred_check_branch
          %149 = sbr.rel (%p147) target = $region28
        $region27: #{tpu_custom_call.1} parent=23 // pred_region
          %p150 = scmp.lt.s32.totalorder %s19, 1
          %s151 = scalar_select %p150, %s19, 1
          %p152 = scmp.lt.s32.totalorder %s20, 1
          %s153 = scalar_select %p152, %s20, 1
          %s154 = smul.addr %s153, 2
          %s155 = smul.addr %s151, 4
          %s156 = sadd.s32 %s154, %s155
          %s157 = smul.addr %s156, 2
          %s158 = scalar_lea.vmem %s0, %s157
        $region28: #{tpu_custom_call.1} parent=23 // pred_fallthru
          _
      $region24: #{tpu_custom_call.1} parent=5 // pred_fallthru
        _
      %p159 = scmp.le.s32.totalorder 1, %s12
      %p160 = scmp.lt.s32.totalorder %s12, 5
      %p161 = pnand %p159, %p160
      %p162 = pneg %p161
      // Predicated region
      $region29: #{tpu_custom_call.1} parent=5 // pred_check
        _
      $region30: #{tpu_custom_call.1} parent=5 // pred_check_branch
        %164 = sbr.rel (%p161) target = $region32
      $region31: #{tpu_custom_call.1} parent=5 // pred_region
        %s165 = ssub.s32 %s12, 1
        %p166 = scmp.lt.s32.totalorder %s21, 1
        %s167 = scalar_select %p166, %s21, 1
        %p168 = scmp.lt.s32.totalorder %s22, 1
        %s169 = scalar_select %p168, %s22, 1
        %s170 = smul.addr %s169, 2
        %s171 = smul.addr %s167, 4
        %s172 = sadd.s32 %s170, %s171
        %s173 = smul.addr %s172, 2
        %s174 = scalar_lea.vmem %s0, %s173
        %p175 = pneg %p52
        %p176 = pneg %p49
        %p177 = pneg %p73
        %p178 = pneg %p70
        %p179 = pneg %p94
        %p180 = pneg %p91
        %p181 = pneg %p122
        %p182 = pneg %p119
        %s183 = sand.u32 %s109, 1
        %s184 = scalar_lea.sflag [#allocation3], %s183
        %s185 = sand.u32 %s109, 1
        %s186 = smul.addr %s185, 8
        %s187 = scalar_lea.vmem [#allocation2], %s186
        %p188 = scmp.lt.s32.totalorder %s21, 1
        %s189 = scalar_select %p188, %s21, 1
        %p190 = scmp.lt.s32.totalorder %s22, 1
        %s191 = scalar_select %p190, %s22, 1
        %s192 = smul.addr %s191, 2
        %s193 = smul.addr %s189, 4
        %s194 = sadd.s32 %s192, %s193
        %s195 = smul.addr %s194, 2
        %s196 = scalar_lea.vmem %s0, %s195
        %v198 = vld [vmem:[%s196] sm:$0x3]
        %v199 = vld [vmem:[%s1] sm:$0xf]
        %v200 = vld [vmem:[%s1 + $0x4] sm:$0xf]
        %v201 = vld [vmem:[%s196] sm:$0xf]
        %s202 = scalar_lea.vmem %s1, 8
        %v203 = vld [vmem:[%s202] sm:$0xf]
        %v204 = vld [vmem:[%s202 + $0x4] sm:$0xf]
        %v207 = vunpack.c.l.b16 %v203
        %v208 = vunpack.c.l.b16 %v204
        %v209 = vpack.c.b16 %v208, %v207
        %211 = vst [vmem:[#allocation1] ss:$4 sm:$0xff] %v201
        %v212 = vld.sshfl [vmem:[#allocation1] sm:$0xff pattern:$0x73625140]
        %v214 = vld.sshfl [vmem:[#allocation1 + $0x8] sm:$0xff pattern:$0x73625140]
        %216 = vrot.lane.b32.xlu0 %v212, 127
        %v217 = vpop.permute.xlu0 %216
        %218 = vrot.lane.b32.xlu0 %v214, 127
        %v219 = vpop.permute.xlu0 %218
        %vm220 = vcmask 1039360
        %v221 = vsel %vm220, %v217, %v219
        %vm222 = vcmask 31744
        %v224 = vsel %vm222, %v209, 0
        %vm226 = vcmask 1041408
        %v228 = vsel %vm226, %v221, 0
        %230 = vmatpush.bf16.msra.mxu0 0
        %231 = vmatpush.bf16.msra.mxu0 0
        %232 = vmatpush.bf16.msra.mxu0 0
        %233 = vmatpush.bf16.msra.mxu0 0
        %234 = vmatpush.bf16.msra.mxu0 0
        %235 = vmatpush.bf16.msra.mxu0 0
        %236 = vmatpush.bf16.msra.mxu0 0
        %237 = vmatpush.bf16.msra.mxu0 %v228
        %238 = vmatmul.bf16.gmra.mxu0 %v224
        %v239 = vpop.f32.mrf.mxu0
        %v240 = vadd.f32 0.0, %v239
        %v241 = vpop.f32.mrf.mxu0
        %v242 = vadd.f32 0.0, %v241
        %243 = vdwg.mxu0
        %v246 = vunpack.c.l.b16 %v199
        %v247 = vunpack.c.l.b16 %v200
        %v248 = vpack.c.b16 %v247, %v246
        %v250 = vsel %vm222, %v248, 0
        %v253 = vsel %vm226, %v198, 0
        %255 = vmatpush.bf16.msra.mxu0 0
        %256 = vmatpush.bf16.msra.mxu0 0
        %257 = vmatpush.bf16.msra.mxu0 0
        %258 = vmatpush.bf16.msra.mxu0 0
        %259 = vmatpush.bf16.msra.mxu0 0
        %260 = vmatpush.bf16.msra.mxu0 0
        %261 = vmatpush.bf16.msra.mxu0 0
        %262 = vmatpush.bf16.msra.mxu0 %v253
        %263 = vmatmul.bf16.gmra.mxu0 %v250
        %v264 = vpop.f32.mrf.mxu0
        %v265 = vadd.f32 %v240, %v264
        %v266 = vpop.f32.mrf.mxu0
        %v267 = vadd.f32 %v242, %v266
        %268 = vdwg.mxu0
        %v269 = vld [vmem:[%s196] sm:$0xf]
        %s270 = scalar_lea.vmem %s1, 16
        %v271 = vld [vmem:[%s270] sm:$0xf]
        %v272 = vld [vmem:[%s270 + $0x4] sm:$0xf]
        %v275 = vunpack.c.l.b16 %v271
        %v276 = vunpack.c.l.b16 %v272
        %v277 = vpack.c.b16 %v276, %v275
        %279 = vst [vmem:[#allocation1] ss:$4 sm:$0xff] %v269
        %v280 = vld.sshfl [vmem:[#allocation1] sm:$0xff pattern:$0x73625140]
        %v282 = vld.sshfl [vmem:[#allocation1 + $0x8] sm:$0xff pattern:$0x73625140]
        %284 = vrot.lane.b32.xlu0 %v280, 126
        %v285 = vpop.permute.xlu0 %284
        %286 = vrot.lane.b32.xlu0 %v282, 126
        %v287 = vpop.permute.xlu0 %286
        %vm288 = vcmask 1031168
        %v289 = vsel %vm288, %v285, %v287
        %v291 = vsel %vm222, %v277, 0
        %v294 = vsel %vm226, %v289, 0
        %296 = vmatpush.bf16.msra.mxu0 0
        %297 = vmatpush.bf16.msra.mxu0 0
        %298 = vmatpush.bf16.msra.mxu0 0
        %299 = vmatpush.bf16.msra.mxu0 0
        %300 = vmatpush.bf16.msra.mxu0 0
        %301 = vmatpush.bf16.msra.mxu0 0
        %302 = vmatpush.bf16.msra.mxu0 0
        %303 = vmatpush.bf16.msra.mxu0 %v294
        %304 = vmatmul.bf16.gmra.mxu0 %v291
        %v305 = vpop.f32.mrf.mxu0
        %v306 = vadd.f32 0.0, %v305
        %v307 = vpop.f32.mrf.mxu0
        %v308 = vadd.f32 0.0, %v307
        %309 = vdwg.mxu0
        %v310 = vadd.f32 %v265, %v306
        %v311 = vadd.f32 %v267, %v308
        %v312 = vld [vmem:[%s196] sm:$0xf]
        %s313 = scalar_lea.vmem %s1, 24
        %v314 = vld [vmem:[%s313] sm:$0xf]
        %v315 = vld [vmem:[%s313 + $0x4] sm:$0xf]
        %v318 = vunpack.c.l.b16 %v314
        %v319 = vunpack.c.l.b16 %v315
        %v320 = vpack.c.b16 %v319, %v318
        %322 = vst [vmem:[#allocation1] ss:$4 sm:$0xff] %v312
        %v323 = vld.sshfl [vmem:[#allocation1] sm:$0xff pattern:$0x73625140]
        %v325 = vld.sshfl [vmem:[#allocation1 + $0x8] sm:$0xff pattern:$0x73625140]
        %327 = vrot.lane.b32.xlu0 %v323, 112
        %v328 = vpop.permute.xlu0 %327
        %329 = vrot.lane.b32.xlu0 %v325, 112
        %v330 = vpop.permute.xlu0 %329
        %vm331 = vcmask 916480
        %v332 = vsel %vm331, %v328, %v330
        %v334 = vsel %vm222, %v320, 0
        %v337 = vsel %vm226, %v332, 0
        %339 = vmatpush.bf16.msra.mxu0 0
        %340 = vmatpush.bf16.msra.mxu0 0
        %341 = vmatpush.bf16.msra.mxu0 0
        %342 = vmatpush.bf16.msra.mxu0 0
        %343 = vmatpush.bf16.msra.mxu0 0
        %344 = vmatpush.bf16.msra.mxu0 0
        %345 = vmatpush.bf16.msra.mxu0 0
        %346 = vmatpush.bf16.msra.mxu0 %v337
        %347 = vmatmul.bf16.gmra.mxu0 %v334
        %v348 = vpop.f32.mrf.mxu0
        %v349 = vadd.f32 0.0, %v348
        %v350 = vpop.f32.mrf.mxu0
        %v351 = vadd.f32 0.0, %v350
        %352 = vdwg.mxu0
        %v353 = vadd.f32 %v310, %v349
        %v354 = vadd.f32 %v311, %v351
        %v355 = vld [vmem:[%s196] sm:$0xf]
        %s356 = scalar_lea.vmem %s1, 32
        %v357 = vld [vmem:[%s356] sm:$0xf]
        %v358 = vld [vmem:[%s356 + $0x4] sm:$0xf]
        %v361 = vunpack.c.l.b16 %v357
        %v362 = vunpack.c.l.b16 %v358
        %v363 = vpack.c.b16 %v362, %v361
        %365 = vst [vmem:[#allocation1] ss:$4 sm:$0xff] %v355
        %v366 = vld.sshfl [vmem:[#allocation1] sm:$0xff pattern:$0x73625140]
        %v368 = vld.sshfl [vmem:[#allocation1 + $0x8] sm:$0xff pattern:$0x73625140]
        %370 = vrot.lane.b32.xlu0 %v366, 111
        %v371 = vpop.permute.xlu0 %370
        %372 = vrot.lane.b32.xlu0 %v368, 111
        %v373 = vpop.permute.xlu0 %372
        %vm374 = vcmask 908288
        %v375 = vsel %vm374, %v371, %v373
        %v377 = vsel %vm222, %v363, 0
        %v380 = vsel %vm226, %v375, 0
        %382 = vmatpush.bf16.msra.mxu0 0
        %383 = vmatpush.bf16.msra.mxu0 0
        %384 = vmatpush.bf16.msra.mxu0 0
        %385 = vmatpush.bf16.msra.mxu0 0
        %386 = vmatpush.bf16.msra.mxu0 0
        %387 = vmatpush.bf16.msra.mxu0 0
        %388 = vmatpush.bf16.msra.mxu0 0
        %389 = vmatpush.bf16.msra.mxu0 %v380
        %390 = vmatmul.bf16.gmra.mxu0 %v377
        %v391 = vpop.f32.mrf.mxu0
        %v392 = vadd.f32 0.0, %v391
        %v393 = vpop.f32.mrf.mxu0
        %v394 = vadd.f32 0.0, %v393
        %395 = vdwg.mxu0
        %v396 = vadd.f32 %v353, %v392
        %v397 = vadd.f32 %v354, %v394
        %v398 = vld [vmem:[%s196] sm:$0xf]
        %s399 = scalar_lea.vmem %s1, 40
        %v400 = vld [vmem:[%s399] sm:$0xf]
        %v401 = vld [vmem:[%s399 + $0x4] sm:$0xf]
        %v404 = vunpack.c.l.b16 %v400
        %v405 = vunpack.c.l.b16 %v401
        %v406 = vpack.c.b16 %v405, %v404
        %408 = vst [vmem:[#allocation1] ss:$4 sm:$0xff] %v398
        %v409 = vld.sshfl [vmem:[#allocation1] sm:$0xff pattern:$0x73625140]
        %v411 = vld.sshfl [vmem:[#allocation1 + $0x8] sm:$0xff pattern:$0x73625140]
        %413 = vrot.lane.b32.xlu0 %v409, 110
        %v414 = vpop.permute.xlu0 %413
        %415 = vrot.lane.b32.xlu0 %v411, 110
        %v416 = vpop.permute.xlu0 %415
        %vm417 = vcmask 900096
        %v418 = vsel %vm417, %v414, %v416
        %v420 = vsel %vm222, %v406, 0
        %v423 = vsel %vm226, %v418, 0
        %425 = vmatpush.bf16.msra.mxu0 0
        %426 = vmatpush.bf16.msra.mxu0 0
        %427 = vmatpush.bf16.msra.mxu0 0
        %428 = vmatpush.bf16.msra.mxu0 0
        %429 = vmatpush.bf16.msra.mxu0 0
        %430 = vmatpush.bf16.msra.mxu0 0
        %431 = vmatpush.bf16.msra.mxu0 0
        %432 = vmatpush.bf16.msra.mxu0 %v423
        %433 = vmatmul.bf16.gmra.mxu0 %v420
        %v434 = vpop.f32.mrf.mxu0
        %v435 = vadd.f32 0.0, %v434
        %v436 = vpop.f32.mrf.mxu0
        %v437 = vadd.f32 0.0, %v436
        %438 = vdwg.mxu0
        %v439 = vadd.f32 %v396, %v435
        %v440 = vadd.f32 %v397, %v437
        %v441 = vld [vmem:[%s196] sm:$0xf]
        %s442 = scalar_lea.vmem %s1, 48
        %v443 = vld [vmem:[%s442] sm:$0xf]
        %v444 = vld [vmem:[%s442 + $0x4] sm:$0xf]
        %v447 = vunpack.c.l.b16 %v443
        %v448 = vunpack.c.l.b16 %v444
        %v449 = vpack.c.b16 %v448, %v447
        %451 = vst [vmem:[#allocation1] ss:$4 sm:$0xff] %v441
        %v452 = vld.sshfl [vmem:[#allocation1] sm:$0xff pattern:$0x73625140]
        %v454 = vld.sshfl [vmem:[#allocation1 + $0x8] sm:$0xff pattern:$0x73625140]
        %456 = vrot.lane.b32.xlu0 %v452, 96
        %v457 = vpop.permute.xlu0 %456
        %458 = vrot.lane.b32.xlu0 %v454, 96
        %v459 = vpop.permute.xlu0 %458
        %vm460 = vcmask 785408
        %v461 = vsel %vm460, %v457, %v459
        %v463 = vsel %vm222, %v449, 0
        %v466 = vsel %vm226, %v461, 0
        %468 = vmatpush.bf16.msra.mxu0 0
        %469 = vmatpush.bf16.msra.mxu0 0
        %470 = vmatpush.bf16.msra.mxu0 0
        %471 = vmatpush.bf16.msra.mxu0 0
        %472 = vmatpush.bf16.msra.mxu0 0
        %473 = vmatpush.bf16.msra.mxu0 0
        %474 = vmatpush.bf16.msra.mxu0 0
        %475 = vmatpush.bf16.msra.mxu0 %v466
        %476 = vmatmul.bf16.gmra.mxu0 %v463
        %v477 = vpop.f32.mrf.mxu0
        %v478 = vadd.f32 0.0, %v477
        %v479 = vpop.f32.mrf.mxu0
        %v480 = vadd.f32 0.0, %v479
        %481 = vdwg.mxu0
        %v482 = vadd.f32 %v439, %v478
        %v483 = vadd.f32 %v440, %v480
        %v484 = vld [vmem:[%s196] sm:$0xf]
        %s485 = scalar_lea.vmem %s1, 56
        %v486 = vld [vmem:[%s485] sm:$0xf]
        %v487 = vld [vmem:[%s485 + $0x4] sm:$0xf]
        %v490 = vunpack.c.l.b16 %v486
        %v491 = vunpack.c.l.b16 %v487
        %v492 = vpack.c.b16 %v491, %v490
        %494 = vst [vmem:[#allocation1] ss:$4 sm:$0xff] %v484
        %v495 = vld.sshfl [vmem:[#allocation1] sm:$0xff pattern:$0x73625140]
        %v497 = vld.sshfl [vmem:[#allocation1 + $0x8] sm:$0xff pattern:$0x73625140]
        %499 = vrot.lane.b32.xlu0 %v495, 95
        %v500 = vpop.permute.xlu0 %499
        %501 = vrot.lane.b32.xlu0 %v497, 95
        %v502 = vpop.permute.xlu0 %501
        %vm503 = vcmask 777216
        %v504 = vsel %vm503, %v500, %v502
        %v506 = vsel %vm222, %v492, 0
        %v509 = vsel %vm226, %v504, 0
        %511 = vmatpush.bf16.msra.mxu0 0
        %512 = vmatpush.bf16.msra.mxu0 0
        %513 = vmatpush.bf16.msra.mxu0 0
        %514 = vmatpush.bf16.msra.mxu0 0
        %515 = vmatpush.bf16.msra.mxu0 0
        %516 = vmatpush.bf16.msra.mxu0 0
        %517 = vmatpush.bf16.msra.mxu0 0
        %518 = vmatpush.bf16.msra.mxu0 %v509
        %519 = vmatmul.bf16.gmra.mxu0 %v506
        %v520 = vpop.f32.mrf.mxu0
        %v521 = vadd.f32 0.0, %v520
        %v522 = vpop.f32.mrf.mxu0
        %v523 = vadd.f32 0.0, %v522
        %524 = vdwg.mxu0
        %v525 = vadd.f32 %v482, %v521
        %v526 = vadd.f32 %v483, %v523
        %v527 = vld [vmem:[%s196] sm:$0xf]
        %s528 = scalar_lea.vmem %s1, 64
        %v529 = vld [vmem:[%s528] sm:$0xf]
        %v530 = vld [vmem:[%s528 + $0x4] sm:$0xf]
        %v533 = vunpack.c.l.b16 %v529
        %v534 = vunpack.c.l.b16 %v530
        %v535 = vpack.c.b16 %v534, %v533
        %537 = vst [vmem:[#allocation1] ss:$4 sm:$0xff] %v527
        %v538 = vld.sshfl [vmem:[#allocation1] sm:$0xff pattern:$0x73625140]
        %v540 = vld.sshfl [vmem:[#allocation1 + $0x8] sm:$0xff pattern:$0x73625140]
        %542 = vrot.lane.b32.xlu0 %v538, 94
        %v543 = vpop.permute.xlu0 %542
        %544 = vrot.lane.b32.xlu0 %v540, 94
        %v545 = vpop.permute.xlu0 %544
        %vm546 = vcmask 769024
        %v547 = vsel %vm546, %v543, %v545
        %v549 = vsel %vm222, %v535, 0
        %v552 = vsel %vm226, %v547, 0
        %554 = vmatpush.bf16.msra.mxu0 0
        %555 = vmatpush.bf16.msra.mxu0 0
        %556 = vmatpush.bf16.msra.mxu0 0
        %557 = vmatpush.bf16.msra.mxu0 0
        %558 = vmatpush.bf16.msra.mxu0 0
        %559 = vmatpush.bf16.msra.mxu0 0
        %560 = vmatpush.bf16.msra.mxu0 0
        %561 = vmatpush.bf16.msra.mxu0 %v552
        %562 = vmatmul.bf16.gmra.mxu0 %v549
        %v563 = vpop.f32.mrf.mxu0
        %v564 = vadd.f32 0.0, %v563
        %v565 = vpop.f32.mrf.mxu0
        %v566 = vadd.f32 0.0, %v565
        %567 = vdwg.mxu0
        %v568 = vadd.f32 %v525, %v564
        %v569 = vadd.f32 %v526, %v566
        %v570 = vld [vmem:[%s2] sm:$0xff]
        %v571 = vld [vmem:[%s2 + $0x8] sm:$0xff]
        %573 = vset.pattern.permute.xlu0 0
        %574 = vperm.xlu0 %573, %v570
        %v575 = vpop.permute.xlu0 %574
        %578 = vset.pattern.permute.xlu0 0
        %579 = vperm.xlu0 %578, %v571
        %v580 = vpop.permute.xlu0 %579
        %v582 = vadd.f32 %v568, %v575
        %v583 = vadd.f32 %v569, %v580
        %v584 = vmul.f32 %v582, 0.2
        %v585 = vmax.f32 %v582, %v584
        %v586 = vsub.f32 0.0, %v583
        %v587 = vmul.f32 %v586, 1.442695
        %v588 = vpow.pop %v587
        %v589 = vadd.f32 %v588, 1.0
        %v590 = vrcp.pop %v589
        %v591 = vmul.f32 %v589, %v590
        %v592 = vsub.f32 1.0, %v591
        %v593 = vmul.f32 %v590, %v592
        %v594 = vadd.f32 %v590, %v593
        %vm595 = vweird.f32 %v589
        %vm596 = vweird.f32 %v590
        %vm597 = vmor %vm595, %vm596
        %v598 = vsel %vm597, %v590, %v594
        %v599 = vand.u32 2147483647, %v589
        %vm600 = vcmp.eq.f32.partialorder %v599, 8.507059e+37
        %v601 = vand.u32 %v589, 2147483648
        %v602 = vor.u32 1.1754944e-38, %v601
        %v603 = vsel %vm600, %v602, %v598
        %v604 = vmul.f32 %v585, %v603
        %605 = vst [vmem:[%s187] sm:$0xff] %v604
        %s606 = sand.u32 %s109, 1
        %s607 = scalar_lea.sflag [#allocation3], %s606
        %s608 = sand.u32 %s109, 1
        %s609 = smul.addr %s608, 8
        %s610 = scalar_lea.vmem [#allocation2], %s609
        // Predicated region
        $region33: #{tpu_custom_call.1} parent=31 // pred_check
          %p611 = pneg %p119
        $region34: #{tpu_custom_call.1} parent=31 // pred_check_branch
          %613 = sbr.rel (%p611) target = $region36
        $region35: #{tpu_custom_call.1} parent=31 // pred_region
          %615 = vsyncadd %s607, 0
          %s616 = smul.addr %s21, 2
          %s617 = sadd.s32 %s22, %s616
          %s618 = smul.addr %s617, 8
          %s619 = scalar_lea.hbm %s3, %s618
          %s621 = sshll.u32 %s610, 4
          %s622 = int_to_ptr.vmem [resolvable:$true] %s621
          %s623 = sshll.u32 %s619, 4
          %s624 = int_to_ptr.hbm [resolvable:$true] %s623
          %626 = dma.vmem_to_hbm [thread:$0]  %s622, 128, %s624, %s607
        $region36: #{tpu_custom_call.1} parent=31 // pred_fallthru
          _
      $region32: #{tpu_custom_call.1} parent=5 // pred_fallthru
        _
      %p627 = scmp.le.s32.totalorder 2, %s12
      // Predicated region
      $region37: #{tpu_custom_call.1} parent=5 // pred_check
        %p628 = pneg %p627
      $region38: #{tpu_custom_call.1} parent=5 // pred_check_branch
        %630 = sbr.rel (%p628) target = $region40
      $region39: #{tpu_custom_call.1} parent=5 // pred_region
        %s631 = ssub.s32 %s12, 2
        // Predicated region
        $region41: #{tpu_custom_call.1} parent=39 // pred_check
          %p632 = pneg %p125
        $region42: #{tpu_custom_call.1} parent=39 // pred_check_branch
          %634 = sbr.rel (%p632) target = $region44
        $region43: #{tpu_custom_call.1} parent=39 // pred_region
          %s635 = sand.u32 %s110, 1
          %s636 = scalar_lea.sflag [#allocation3], %s635
          %s637 = sand.u32 %s110, 1
          %s638 = smul.addr %s637, 8
          %s639 = scalar_lea.vmem [#allocation2], %s638
          %641 = dma.done %s636, 128
        $region44: #{tpu_custom_call.1} parent=39 // pred_fallthru
          _
      $region40: #{tpu_custom_call.1} parent=5 // pred_fallthru
        _
    $region6: #{tpu_custom_call.1} parent=1 // loop_footer
      %s16 = sadd.s32 1, %s12
    $region7: #{tpu_custom_call.1} parent=1 // loop_footer_branch
      %11 = sbr.rel target = $region3
    $region8: #{tpu_custom_call.1} parent=1 // loop_exit
      _
    %642 = vsyncpa [#allocation3], 1
    %s643 = scalar_lea.sflag [#allocation3], 1
    %644 = vsyncpa %s643, 1

</llo_original>
